<compile_context>
chip_gen: v7x
topology: tpu7x:2x2x1
jax: 0.10.0
libtpu: 0.0.40
codegen_flags: <defaults>
</compile_context>

<pallas_src>
import functools

import jax
import jax.numpy as jnp
from jax.experimental import pallas as pl
from jax.experimental.pallas import tpu as pltpu

_LANE = 128      # vreg lane width -> last dim of every tile
_TM_MAX = 1024   # max rows per tile (1024*128*4B = 512 KiB per f32 buffer)
_PARALLEL = 2    # leading "parallel" grid axis (v7x has 2 TensorCores)


def _sublane_multiple(dtype) -> int:
    """Row-tile granularity required by the dtype's native (sublane, lane) tiling."""
    return {4: 8, 2: 16, 1: 32}.get(jnp.dtype(dtype).itemsize, 8)


def _rmse_partial_kernel(a_ref, b_ref, out_ref, acc_ref, *,
                         tm, rows_total, n_blocks, steps):
    """Per-chunk partial sum of squared differences.

    Grid is (P, steps): axis 0 is "parallel" (one contiguous chunk of row
    tiles per TensorCore), axis 1 is the sequential reduction over that
    chunk's tiles.  Each chunk writes its per-lane partial sums to its own
    output slot; the wrapper combines them and applies mean + sqrt.
    """
    p = pl.program_id(0)
    t = pl.program_id(1)
    blk = p * steps + t          # logical row-tile index

    @pl.when(t == 0)
    def _init():
        acc_ref[...] = jnp.zeros_like(acc_ref)

    @pl.when(blk < n_blocks)     # skip clamped (out-of-range) tiles entirely
    def _accumulate():
        d = a_ref[...].astype(jnp.float32) - b_ref[...].astype(jnp.float32)
        d2 = d * d
        # Mask rows past the true extent (partial last tile reads garbage).
        row_ids = jax.lax.broadcasted_iota(jnp.int32, (tm, 1), 0)
        valid = (blk * tm + row_ids) < rows_total
        d2 = jnp.where(valid, d2, 0.0)
        # Per-lane partial sums kept in VMEM (single sublane reduce per tile).
        acc_ref[...] += jnp.sum(d2, axis=0, keepdims=True)

    @pl.when(t == steps - 1)
    def _finalize():
        out_ref[0] = acc_ref[...]


def rmse_loss(yhat: jax.Array, y: jax.Array) -> jax.Array:
    """sqrt(mean((yhat - y)^2)) == torch.sqrt(nn.MSELoss()(yhat, y)). Scalar f32."""
    assert yhat.shape == y.shape, "yhat and y must have the same shape"
    n_total = int(yhat.size)
    assert n_total > 0, "empty input"

    a = yhat.reshape(-1)          # native dtype: no wrapper-side upcast copy
    b = y.reshape(-1)

    # Only a (<128-element) pad when the flat size isn't lane-divisible; the
    # padded zeros contribute 0 to the squared-error sum and we divide by the
    # TRUE element count below.
    lane_pad = (-n_total) % _LANE
    if lane_pad:
        a = jnp.pad(a, (0, lane_pad))
        b = jnp.pad(b, (0, lane_pad))
    rows = (n_total + lane_pad) // _LANE
    a2 = a.reshape(rows, _LANE)
    b2 = b.reshape(rows, _LANE)

    sub = max(_sublane_multiple(a2.dtype), _sublane_multiple(b2.dtype))
    tm = min(_TM_MAX, pl.cdiv(rows, sub) * sub)        # rows per tile
    n_blocks = pl.cdiv(rows, tm)                       # total row tiles
    steps = pl.cdiv(n_blocks, _PARALLEL)               # tiles per parallel chunk
    grid = (_PARALLEL, steps)

    def in_map(p, t):
        # Clamp so the DMA always stays in bounds; the kernel skips the
        # (at most one) logically-invalid tile via `blk < n_blocks`.
        return (jnp.minimum(p * steps + t, n_blocks - 1), 0)

    bytes_in = n_total * (jnp.dtype(a2.dtype).itemsize
                          + jnp.dtype(b2.dtype).itemsize)

    partials = pl.pallas_call(
        functools.partial(_rmse_partial_kernel, tm=tm, rows_total=rows,
                          n_blocks=n_blocks, steps=steps),
        out_shape=jax.ShapeDtypeStruct((_PARALLEL, 1, _LANE), jnp.float32),
        grid_spec=pltpu.PrefetchScalarGridSpec(
            num_scalar_prefetch=0,
            grid=grid,
            in_specs=[
                pl.BlockSpec((tm, _LANE), in_map),
                pl.BlockSpec((tm, _LANE), in_map),
            ],
            out_specs=pl.BlockSpec((1, 1, _LANE), lambda p, t: (p, 0, 0)),
            scratch_shapes=[pltpu.VMEM((1, _LANE), jnp.float32)],
        ),
        compiler_params=pltpu.CompilerParams(
            dimension_semantics=("parallel", "arbitrary")),
        cost_estimate=pl.CostEstimate(
            flops=3 * n_total,
            transcendentals=0,
            bytes_accessed=bytes_in + _PARALLEL * _LANE * 4),
    )(a2, b2)

    # Combine per-chunk per-lane partial sums; divide by the TRUE element count.
    return jnp.sqrt(jnp.sum(partials) / jnp.float32(n_total))


if __name__ == "__main__":
    key = jax.random.PRNGKey(0)
    k1, k2 = jax.random.split(key)

    # Small NCHW-style shapes, consistent with a typical conv-model output.
    shape = (2, 4, 16, 16)
    yhat = jax.random.normal(k1, shape, dtype=jnp.float32)
    y = jax.random.normal(k2, shape, dtype=jnp.float32)

    loss = rmse_loss(yhat, y)
    jax.block_until_ready(loss)

    # Pure-JAX reference (same math as torch.sqrt(nn.MSELoss()(yhat, y))).
    ref = jnp.sqrt(jnp.mean((yhat - y) ** 2))
    assert jnp.allclose(loss, ref, rtol=1e-5, atol=1e-6), (loss, ref)

    print("KERNEL_OK")
</pallas_src>

<mosaic_0001>
module attributes {stable_mosaic.version = 11 : i64} {
  func.func @_rmse_partial_kernel(%arg0: i32, %arg1: i32, %arg2: memref<16x128xf32, #tpu.memory_space<vmem>>, %arg3: memref<16x128xf32, #tpu.memory_space<vmem>>, %arg4: memref<1x1x128xf32, #tpu.memory_space<vmem>>, %arg5: memref<1x128xf32, #tpu.memory_space<vmem>>) attributes {dimension_semantics = [#tpu.dimension_semantics<parallel>, #tpu.dimension_semantics<arbitrary>], iteration_bounds = array<i64: 2, 1>, scalar_prefetch = 0 : i64, scratch_operands = 1 : i64, tpu.core_type = #tpu.core_type<tc>, window_params = [{transform_indices = @transform_0, window_bounds = array<i64: 16, 128>}, {transform_indices = @transform_1, window_bounds = array<i64: 16, 128>}, {transform_indices = @transform_2, window_bounds = array<i64: 1, 1, 128>}]} {
    %c1_i32 = arith.constant 1 : i32
    %0 = arith.muli %arg0, %c1_i32 : i32
    %1 = arith.addi %0, %arg1 : i32
    %c0_i32 = arith.constant 0 : i32
    %2 = arith.cmpi eq, %arg1, %c0_i32 : i32
    %3 = arith.extui %2 : i1 to i32
    %c0_i32_0 = arith.constant 0 : i32
    %4 = arith.cmpi ne, %3, %c0_i32_0 : i32
    scf.if %4 {
      %cst = arith.constant 0.000000e+00 : f32
      %11 = vector.broadcast %cst : f32 to vector<1x128xf32>
      %c0 = arith.constant 0 : index
      %c0_5 = arith.constant 0 : index
      %12 = vector.load %arg5[%c0, %c0_5] : memref<1x128xf32, #tpu.memory_space<vmem>>, vector<1x128xf32>
      tpu.vector_store %arg5[%c0, %c0_5], %11 {strides = array<i32>} : memref<1x128xf32, #tpu.memory_space<vmem>>, vector<1x128xf32>,
    } else {
    }
    %c1_i32_1 = arith.constant 1 : i32
    %5 = arith.cmpi slt, %1, %c1_i32_1 : i32
    %6 = arith.extui %5 : i1 to i32
    %c0_i32_2 = arith.constant 0 : i32
    %7 = arith.cmpi ne, %6, %c0_i32_2 : i32
    scf.if %7 {
      %c0 = arith.constant 0 : index
      %c0_5 = arith.constant 0 : index
      %11 = vector.load %arg2[%c0, %c0_5] : memref<16x128xf32, #tpu.memory_space<vmem>>, vector<16x128xf32>
      %c0_6 = arith.constant 0 : index
      %c0_7 = arith.constant 0 : index
      %12 = vector.load %arg3[%c0_6, %c0_7] : memref<16x128xf32, #tpu.memory_space<vmem>>, vector<16x128xf32>
      %13 = arith.subf %11, %12 : vector<16x128xf32>
      %14 = arith.mulf %13, %13 : vector<16x128xf32>
      %15 = tpu.iota {dimensions = array<i32: 0>} : vector<16x1xi32>
      %c16_i32 = arith.constant 16 : i32
      %16 = arith.muli %1, %c16_i32 : i32
      %17 = vector.broadcast %16 : i32 to vector<16x1xi32>
      %18 = arith.addi %17, %15 : vector<16x1xi32>
      %c16_i32_8 = arith.constant 16 : i32
      %19 = vector.broadcast %c16_i32_8 : i32 to vector<16x1xi32>
      %20 = arith.cmpi slt, %18, %19 : vector<16x1xi32>
      %cst = arith.constant 0.000000e+00 : f32
      %21 = vector.shape_cast %20 : vector<16x1xi1> to vector<16x1xi1>
      %22 = vector.broadcast %21 : vector<16x1xi1> to vector<16x128xi1>
      %23 = vector.broadcast %cst : f32 to vector<16x128xf32>
      %24 = arith.select %22, %14, %23 : vector<16x128xi1>, vector<16x128xf32>
      %c0_9 = arith.constant 0 : index
      %c0_10 = arith.constant 0 : index
      %25 = vector.load %arg5[%c0_9, %c0_10] : memref<1x128xf32, #tpu.memory_space<vmem>>, vector<1x128xf32>
      %cst_11 = arith.constant dense<0.000000e+00> : vector<128xf32>
      %26 = vector.multi_reduction <add>, %24, %cst_11 [0] : vector<16x128xf32> to vector<128xf32>
      %27 = vector.shape_cast %26 : vector<128xf32> to vector<1x128xf32>
      %28 = arith.addf %25, %27 : vector<1x128xf32>
      %c0_12 = arith.constant 0 : index
      %c0_13 = arith.constant 0 : index
      %29 = vector.load %arg5[%c0_12, %c0_13] : memref<1x128xf32, #tpu.memory_space<vmem>>, vector<1x128xf32>
      tpu.vector_store %arg5[%c0_12, %c0_13], %28 {strides = array<i32>} : memref<1x128xf32, #tpu.memory_space<vmem>>, vector<1x128xf32>,
    } else {
    }
    %c0_i32_3 = arith.constant 0 : i32
    %8 = arith.cmpi eq, %arg1, %c0_i32_3 : i32
    %9 = arith.extui %8 : i1 to i32
    %c0_i32_4 = arith.constant 0 : i32
    %10 = arith.cmpi ne, %9, %c0_i32_4 : i32
    scf.if %10 {
      %c0 = arith.constant 0 : index
      %c0_5 = arith.constant 0 : index
      %11 = vector.load %arg5[%c0, %c0_5] : memref<1x128xf32, #tpu.memory_space<vmem>>, vector<1x128xf32>
      %c0_6 = arith.constant 0 : index
      %c0_7 = arith.constant 0 : index
      %c0_8 = arith.constant 0 : index
      %12 = vector.load %arg4[%c0_6, %c0_7, %c0_8] : memref<1x1x128xf32, #tpu.memory_space<vmem>>, vector<1x1x128xf32>
      %13 = vector.shape_cast %12 : vector<1x1x128xf32> to vector<1x128xf32>
      %14 = vector.shape_cast %11 : vector<1x128xf32> to vector<1x1x128xf32>
      tpu.vector_store %arg4[%c0_6, %c0_7, %c0_8], %14 {strides = array<i32>} : memref<1x1x128xf32, #tpu.memory_space<vmem>>, vector<1x1x128xf32>,
    } else {
    }
    return
  }
  func.func @transform_0(%arg0: i32, %arg1: i32) -> (i32, i32) {
    %c1_i32 = arith.constant 1 : i32
    %0 = arith.muli %arg0, %c1_i32 : i32
    %1 = arith.addi %0, %arg1 : i32
    %c0_i32 = arith.constant 0 : i32
    %2 = arith.minsi %1, %c0_i32 : i32
    %c0_i32_0 = arith.constant 0 : i32
    %c0_i32_1 = arith.constant 0 : i32
    return %2, %c0_i32_0 : i32, i32
  }
  func.func @transform_1(%arg0: i32, %arg1: i32) -> (i32, i32) {
    %c1_i32 = arith.constant 1 : i32
    %0 = arith.muli %arg0, %c1_i32 : i32
    %1 = arith.addi %0, %arg1 : i32
    %c0_i32 = arith.constant 0 : i32
    %2 = arith.minsi %1, %c0_i32 : i32
    %c0_i32_0 = arith.constant 0 : i32
    %c0_i32_1 = arith.constant 0 : i32
    return %2, %c0_i32_0 : i32, i32
  }
  func.func @transform_2(%arg0: i32, %arg1: i32) -> (i32, i32, i32) {
    %c0_i32 = arith.constant 0 : i32
    %c0_i32_0 = arith.constant 0 : i32
    %c0_i32_1 = arith.constant 0 : i32
    return %arg0, %c0_i32, %c0_i32_0 : i32, i32, i32
  }
}

</mosaic_0001>

<llo_original>
// kernel: tpu_custom_call.1
$region0: #{tpu_custom_call.1}
  #allocation0 [shape = 'u32[]', space=smem, size = 0x4, offset = 0x4, fixed_abs, tag = 'smem constant byte address 0x4 - core index']
  #allocation1 [shape = 'u32[144,128]{1,0:T(1,128)}', space=vmem, size = 0x12000, scoped, tag = 'internal scratch']
  #allocation2 [shape = 'f32[1,128]{1,0:T(1,128)}', space=vmem, size = 0x200, scoped, tag = 'scratch operand']
  %s0 = inlined_call_operand.hbm [shape: f32[16,128], index: 0, kind: input, shape index: {}]
  %s1 = inlined_call_operand.hbm [shape: f32[16,128], index: 1, kind: input, shape index: {}]
  %s2 = inlined_call_operand.hbm [shape: f32[2,1,128], index: 2, kind: output, shape index: {}]
  %s3 = sld [smem:[#allocation0]]
  $region61: #{tpu_custom_call.1} parent=0
    _
  %s5 = ssub.s32 1, %s3
  %s6 = scalar_select 0, %s5, %s3
  $region1: #{tpu_custom_call.1} parent=0
    #allocation3 [shape = 'u8[16384]{0}', space=vmem, size = 0x4000, scoped, tag = 'input window, operand 0']
    #allocation4 [shape = 's32[2]{0}', space=sflag, size = 0x8, scoped, tag = 'scoped memory for tpu_custom_call.1']
    #allocation5 [shape = 's32[2]{0}', space=sflag, size = 0x8, scoped, tag = 'scoped memory for tpu_custom_call.1']
    #allocation6 [shape = 'u8[16384]{0}', space=vmem, size = 0x4000, scoped, tag = 'input window, operand 1']
    #allocation7 [shape = 's32[2]{0}', space=sflag, size = 0x8, scoped, tag = 'scoped memory for tpu_custom_call.1']
    #allocation8 [shape = 'u8[1024]{0}', space=vmem, size = 0x400, scoped, tag = 'output window, operand 0']
    %7 = vsyncpa [#allocation4], 0
    %s8 = scalar_lea.sflag [#allocation4], 1
    %9 = vsyncpa %s8, 0
    %10 = vsyncpa [#allocation7], 0
    %s11 = scalar_lea.sflag [#allocation7], 1
    %12 = vsyncpa %s11, 0
    %13 = vsyncpa [#allocation5], 0
    %s14 = scalar_lea.sflag [#allocation5], 1
    %15 = vsyncpa %s14, 0
    loop: start=0, step=1, limit=4
    $region2: #{tpu_custom_call.1} parent=1 // loop_pre_header
      _
    $region3: #{tpu_custom_call.1} parent=1 // loop_header
      %s17 = sphi 0, %s21
      %p18 = scmp.ge.s32.totalorder %s17, 4
      %s24 = sphi 0, %s36
      %s25 = sphi 0, %s32
      %s26 = sphi 0, %s24
      %s27 = sphi 0, %s25
      %s28 = sphi 0, %s26
      %s29 = sphi 0, %s27
      %s45 = sphi 0, %s47
      %s48 = sphi 0, %s45
      %s49 = sphi 0, %s48
      %s65 = sphi 0, %s49
      %s77 = sphi 0, %s79
      %s80 = sphi 0, %s77
      %s81 = sphi 0, %s80
      %s97 = sphi 0, %s81
      %s103 = sphi 0, %s105
      %s106 = sphi 0, %s103
      %s107 = sphi 0, %s106
      %s123 = sphi 0, %s107
    $region4: #{tpu_custom_call.1} parent=1 // loop_header_branch
      %20 = sbr.rel (%p18) target = $region8
    $region5: #{tpu_custom_call.1} parent=1 // loop_body
      %s22 = ssub.s32 %s17, 1
      %s23 = ssub.s32 %s17, 2
      %s30 = sadd.s32 1, %s25
      %p31 = scmp.ge.s32.totalorder %s30, 1
      %s32 = scalar_select %p31, 0, %s30
      %s33 = sadd.s32 1, %s24
      %s34 = scalar_select %p31, %s33, %s24
      %p35 = scmp.ge.s32.totalorder %s34, 2
      %s36 = scalar_select %p35, 0, %s34
      %s37 = sadd.s32 %s24, %s25
      %p38 = scmp.lt.s32.totalorder %s37, 0
      %s39 = scalar_select %p38, %s37, 0
      %s40 = sadd.s32 %s36, %s32
      %p41 = scmp.lt.s32.totalorder %s40, 0
      %s42 = scalar_select %p41, %s40, 0
      %s43 = ssub.s32 %s39, %s42
      %p44 = scmp.eq.s32.totalorder %s43, 0
      %s46 = sadd.s32 %s45, 1
      %s47 = scalar_select %p44, %s45, %s46
      %p50 = pneg %p44
      %p51 = scmp.eq.s32.totalorder %s17, 1
      %p52 = por %p50, %p51
      %p53 = scmp.ne.s32.totalorder %s45, %s48
      %p54 = scmp.eq.s32.totalorder %s17, 0
      %p55 = por %p53, %p54
      %p56 = scmp.ne.s32.totalorder %s45, %s48
      %p57 = scmp.eq.s32.totalorder %s22, 1
      %p58 = por %p56, %p57
      %p59 = scmp.ne.s32.totalorder %s48, %s49
      %p60 = scmp.eq.s32.totalorder %s22, 0
      %p61 = por %p59, %p60
      %p62 = scmp.ne.s32.totalorder %s48, %s49
      %p63 = scmp.eq.s32.totalorder %s23, 1
      %p64 = por %p62, %p63
      %p66 = scmp.ne.s32.totalorder %s49, %s65
      %p67 = scmp.eq.s32.totalorder %s23, 0
      %p68 = por %p66, %p67
      %s69 = sadd.s32 %s24, %s25
      %p70 = scmp.lt.s32.totalorder %s69, 0
      %s71 = scalar_select %p70, %s69, 0
      %s72 = sadd.s32 %s36, %s32
      %p73 = scmp.lt.s32.totalorder %s72, 0
      %s74 = scalar_select %p73, %s72, 0
      %s75 = ssub.s32 %s71, %s74
      %p76 = scmp.eq.s32.totalorder %s75, 0
      %s78 = sadd.s32 %s77, 1
      %s79 = scalar_select %p76, %s77, %s78
      %p82 = pneg %p76
      %p83 = scmp.eq.s32.totalorder %s17, 1
      %p84 = por %p82, %p83
      %p85 = scmp.ne.s32.totalorder %s77, %s80
      %p86 = scmp.eq.s32.totalorder %s17, 0
      %p87 = por %p85, %p86
      %p88 = scmp.ne.s32.totalorder %s77, %s80
      %p89 = scmp.eq.s32.totalorder %s22, 1
      %p90 = por %p88, %p89
      %p91 = scmp.ne.s32.totalorder %s80, %s81
      %p92 = scmp.eq.s32.totalorder %s22, 0
      %p93 = por %p91, %p92
      %p94 = scmp.ne.s32.totalorder %s80, %s81
      %p95 = scmp.eq.s32.totalorder %s23, 1
      %p96 = por %p94, %p95
      %p98 = scmp.ne.s32.totalorder %s81, %s97
      %p99 = scmp.eq.s32.totalorder %s23, 0
      %p100 = por %p98, %p99
      %s101 = ssub.s32 %s24, %s36
      %p102 = scmp.eq.s32.totalorder %s101, 0
      %s104 = sadd.s32 %s103, 1
      %s105 = scalar_select %p102, %s103, %s104
      %p108 = pneg %p102
      %p109 = scmp.eq.s32.totalorder %s17, 1
      %p110 = por %p108, %p109
      %p111 = scmp.ne.s32.totalorder %s103, %s106
      %p112 = scmp.eq.s32.totalorder %s17, 0
      %p113 = por %p111, %p112
      %p114 = scmp.ne.s32.totalorder %s103, %s106
      %p115 = scmp.eq.s32.totalorder %s22, 1
      %p116 = por %p114, %p115
      %p117 = scmp.ne.s32.totalorder %s106, %s107
      %p118 = scmp.eq.s32.totalorder %s22, 0
      %p119 = por %p117, %p118
      %p120 = scmp.ne.s32.totalorder %s106, %s107
      %p121 = scmp.eq.s32.totalorder %s23, 1
      %p122 = por %p120, %p121
      %p124 = scmp.ne.s32.totalorder %s107, %s123
      %p125 = scmp.eq.s32.totalorder %s23, 0
      %p126 = por %p124, %p125
      %p127 = scmp.le.s32.totalorder 1, %s17
      %p128 = scmp.lt.s32.totalorder %s17, 3
      %p129 = pnand %p127, %p128
      %p130 = pneg %p129
      // Predicated region
      $region9: #{tpu_custom_call.1} parent=5 // pred_check
        _
      $region10: #{tpu_custom_call.1} parent=5 // pred_check_branch
        %132 = sbr.rel (%p129) target = $region12
      $region11: #{tpu_custom_call.1} parent=5 // pred_region
        %s133 = ssub.s32 %s17, 1
      $region12: #{tpu_custom_call.1} parent=5 // pred_fallthru
        _
      %p134 = scmp.lt.s32.totalorder %s17, 2
      // Predicated region
      $region13: #{tpu_custom_call.1} parent=5 // pred_check
        %p135 = pneg %p134
      $region14: #{tpu_custom_call.1} parent=5 // pred_check_branch
        %137 = sbr.rel (%p135) target = $region16
      $region15: #{tpu_custom_call.1} parent=5 // pred_region
        // Predicated region
        $region17: #{tpu_custom_call.1} parent=15 // pred_check
          %p138 = pneg %p55
        $region18: #{tpu_custom_call.1} parent=15 // pred_check_branch
          %140 = sbr.rel (%p138) target = $region20
        $region19: #{tpu_custom_call.1} parent=15 // pred_region
          %s141 = sand.u32 %s45, 1
          %s142 = scalar_lea.sflag [#allocation4], %s141
          %s143 = sand.u32 %s45, 1
          %s144 = smul.addr %s143, 16
          %s145 = scalar_lea.vmem [#allocation3], %s144
          %s146 = sadd.s32 %s24, %s25
          %p147 = scmp.lt.s32.totalorder %s146, 0
          %s148 = scalar_select %p147, %s146, 0
          %s149 = smul.u32 2, %s148
          %s151 = ssub.s32 256, 256
          %152 = vsyncadd %s142, %s151
          %s153 = smul.addr %s149, 128
          %s154 = scalar_lea.hbm %s0, %s153
          %s155 = sshll.u32 %s145, 4
          %s156 = int_to_ptr.vmem [resolvable:$true] %s155
          %161 = dma.hbm_to_vmem [thread:$0]  %s154, 256, %s156, %s142, 128, 128, 8
        $region20: #{tpu_custom_call.1} parent=15 // pred_fallthru
          _
        // Predicated region
        $region21: #{tpu_custom_call.1} parent=15 // pred_check
          %p162 = pneg %p87
        $region22: #{tpu_custom_call.1} parent=15 // pred_check_branch
          %164 = sbr.rel (%p162) target = $region24
        $region23: #{tpu_custom_call.1} parent=15 // pred_region
          %s165 = sand.u32 %s77, 1
          %s166 = scalar_lea.sflag [#allocation7], %s165
          %s167 = sand.u32 %s77, 1
          %s168 = smul.addr %s167, 16
          %s169 = scalar_lea.vmem [#allocation6], %s168
          %s170 = sadd.s32 %s24, %s25
          %p171 = scmp.lt.s32.totalorder %s170, 0
          %s172 = scalar_select %p171, %s170, 0
          %s173 = smul.u32 2, %s172
          %s175 = ssub.s32 256, 256
          %176 = vsyncadd %s166, %s175
          %s177 = smul.addr %s173, 128
          %s178 = scalar_lea.hbm %s1, %s177
          %s179 = sshll.u32 %s169, 4
          %s180 = int_to_ptr.vmem [resolvable:$true] %s179
          %185 = dma.hbm_to_vmem [thread:$0]  %s178, 256, %s180, %s166, 128, 128, 8
        $region24: #{tpu_custom_call.1} parent=15 // pred_fallthru
          _
      $region16: #{tpu_custom_call.1} parent=5 // pred_fallthru
        _
      %p186 = scmp.le.s32.totalorder 1, %s17
      %p187 = scmp.lt.s32.totalorder %s17, 3
      %p188 = pnand %p186, %p187
      %p189 = pneg %p188
      // Predicated region
      $region25: #{tpu_custom_call.1} parent=5 // pred_check
        _
      $region26: #{tpu_custom_call.1} parent=5 // pred_check_branch
        %191 = sbr.rel (%p188) target = $region28
      $region27: #{tpu_custom_call.1} parent=5 // pred_region
        %s192 = ssub.s32 %s17, 1
        %s193 = sand.u32 %s48, 1
        %s194 = scalar_lea.sflag [#allocation4], %s193
        %s195 = sand.u32 %s48, 1
        %s196 = smul.addr %s195, 16
        %s197 = scalar_lea.vmem [#allocation3], %s196
        // Predicated region
        $region29: #{tpu_custom_call.1} parent=27 // pred_check
          %p198 = pneg %p61
        $region30: #{tpu_custom_call.1} parent=27 // pred_check_branch
          %200 = sbr.rel (%p198) target = $region32
        $region31: #{tpu_custom_call.1} parent=27 // pred_region
          %201 = dma.done %s194, 256
        $region32: #{tpu_custom_call.1} parent=27 // pred_fallthru
          _
        %s202 = sand.u32 %s80, 1
        %s203 = scalar_lea.sflag [#allocation7], %s202
        %s204 = sand.u32 %s80, 1
        %s205 = smul.addr %s204, 16
        %s206 = scalar_lea.vmem [#allocation6], %s205
        // Predicated region
        $region33: #{tpu_custom_call.1} parent=27 // pred_check
          %p207 = pneg %p93
        $region34: #{tpu_custom_call.1} parent=27 // pred_check_branch
          %209 = sbr.rel (%p207) target = $region36
        $region35: #{tpu_custom_call.1} parent=27 // pred_region
          %210 = dma.done %s203, 256
        $region36: #{tpu_custom_call.1} parent=27 // pred_fallthru
          _
        %s211 = sand.u32 %s48, 1
        %s212 = scalar_lea.sflag [#allocation4], %s211
        %s213 = sand.u32 %s48, 1
        %s214 = smul.addr %s213, 16
        %s215 = scalar_lea.vmem [#allocation3], %s214
        %p216 = pneg %p61
        %p217 = pneg %p58
        %s218 = sand.u32 %s80, 1
        %s219 = scalar_lea.sflag [#allocation7], %s218
        %s220 = sand.u32 %s80, 1
        %s221 = smul.addr %s220, 16
        %s222 = scalar_lea.vmem [#allocation6], %s221
        %p223 = pneg %p93
        %p224 = pneg %p90
        %p225 = pneg %p119
        %p226 = pneg %p116
        %s227 = sand.u32 %s106, 1
        %s228 = scalar_lea.sflag [#allocation5], %s227
        %s229 = sand.u32 %s106, 1
        %s230 = scalar_lea.vmem [#allocation8], %s229
        %s231 = sadd.s32 %s26, %s27
        %p232 = scmp.lt.s32.totalorder %s231, 0
        %s233 = scalar_select %p232, %s231, 0
        %s234 = smul.u32 2, %s233
        %s235 = sadd.s32 %s26, %s27
        %p236 = scmp.lt.s32.totalorder %s235, 0
        %s237 = scalar_select %p236, %s235, 0
        %s238 = smul.u32 2, %s237
        %s239 = sadd.s32 %s26, %s27
        %p240 = scmp.eq.s32.totalorder %s27, 0
        // Predicated region
        $region37: #{tpu_custom_call.1} parent=27 // pred_check
          %p241 = pneg %p240
        $region38: #{tpu_custom_call.1} parent=27 // pred_check_branch
          %243 = sbr.rel (%p241) target = $region40
        $region39: #{tpu_custom_call.1} parent=27 // pred_region
          %244 = vst [vmem:[#allocation2] sm:$0x1] 0.0
        $region40: #{tpu_custom_call.1} parent=27 // pred_fallthru
          _
        %p245 = scmp.lt.s32.totalorder %s239, 1
        // Predicated region
        $region41: #{tpu_custom_call.1} parent=27 // pred_check
          %p246 = pneg %p245
        $region42: #{tpu_custom_call.1} parent=27 // pred_check_branch
          %248 = sbr.rel (%p246) target = $region44
        $region43: #{tpu_custom_call.1} parent=27 // pred_region
          %v249 = vld [vmem:[%s197] sm:$0xff]
          %v250 = vld [vmem:[%s197 + $0x8] sm:$0xff]
          %v251 = vld [vmem:[%s206] sm:$0xff]
          %v252 = vld [vmem:[%s206 + $0x8] sm:$0xff]
          %v253 = vsub.f32 %v249, %v251
          %v254 = vsub.f32 %v250, %v252
          %v255 = vmul.f32 %v253, %v253
          %v256 = vmul.f32 %v254, %v254
          %v257 = vlaneseq
          %v258 = vshrl.u32 %v257, 7
          %v259 = vadd.s32 %v258, 8
          %s260 = smul.u32 %s239, 16
          %v261 = vstv %s260
          %v262 = vadd.s32 %v261, %v258
          %v263 = vadd.s32 %v261, %v259
          %vm264 = vcmp.lt.s32.totalorder %v262, 16
          %vm265 = vcmp.lt.s32.totalorder %v263, 16
          %v266 = vsel %vm264, 1, 0
          %v267 = vsel %vm265, 1, 0
          %vm268 = vcmp.eq.s32.totalorder %v266, 1
          %vm269 = vcmp.eq.s32.totalorder %v267, 1
          %v270 = vsel %vm268, %v255, 0.0
          %v271 = vsel %vm269, %v256, 0.0
          %v272 = vld [vmem:[#allocation2] sm:$0x1]
          %v273 = vadd.f32 %v270, %v271
          %v274 = vrot.slane %v273, 4
          %v275 = vadd.f32 %v273, %v274
          %v276 = vrot.slane %v275, 2
          %v277 = vadd.f32 %v275, %v276
          %v278 = vrot.slane %v277, 1
          %v279 = vadd.f32 %v277, %v278
          %v280 = vadd.f32 %v272, %v279
          %281 = vst [vmem:[#allocation2] sm:$0x1] %v280
        $region44: #{tpu_custom_call.1} parent=27 // pred_fallthru
          _
        // Predicated region
        $region45: #{tpu_custom_call.1} parent=27 // pred_check
          %p282 = pneg %p240
        $region46: #{tpu_custom_call.1} parent=27 // pred_check_branch
          %284 = sbr.rel (%p282) target = $region48
        $region47: #{tpu_custom_call.1} parent=27 // pred_region
          %v285 = vld [vmem:[#allocation2] sm:$0x1]
          %286 = vst [vmem:[%s230] sm:$0x1] %v285
        $region48: #{tpu_custom_call.1} parent=27 // pred_fallthru
          _
        %s287 = sand.u32 %s106, 1
        %s288 = scalar_lea.sflag [#allocation5], %s287
        %s289 = sand.u32 %s106, 1
        %s290 = scalar_lea.vmem [#allocation8], %s289
        // Predicated region
        $region49: #{tpu_custom_call.1} parent=27 // pred_check
          %p291 = pneg %p116
        $region50: #{tpu_custom_call.1} parent=27 // pred_check_branch
          %293 = sbr.rel (%p291) target = $region52
        $region51: #{tpu_custom_call.1} parent=27 // pred_region
          %s295 = ssub.s32 16, 16
          %296 = vsyncadd %s288, %s295
          %s297 = smul.addr %s26, 16
          %s298 = scalar_lea.hbm %s2, %s297
          %s300 = sshll.u32 %s290, 4
          %s301 = int_to_ptr.vmem [resolvable:$true] %s300
          %303 = dma.vmem_to_hbm [thread:$0]  %s301, 16, %s298, %s288
        $region52: #{tpu_custom_call.1} parent=27 // pred_fallthru
          _
      $region28: #{tpu_custom_call.1} parent=5 // pred_fallthru
        _
      %p304 = scmp.le.s32.totalorder 2, %s17
      // Predicated region
      $region53: #{tpu_custom_call.1} parent=5 // pred_check
        %p305 = pneg %p304
      $region54: #{tpu_custom_call.1} parent=5 // pred_check_branch
        %307 = sbr.rel (%p305) target = $region56
      $region55: #{tpu_custom_call.1} parent=5 // pred_region
        %s308 = ssub.s32 %s17, 2
        // Predicated region
        $region57: #{tpu_custom_call.1} parent=55 // pred_check
          %p309 = pneg %p122
        $region58: #{tpu_custom_call.1} parent=55 // pred_check_branch
          %311 = sbr.rel (%p309) target = $region60
        $region59: #{tpu_custom_call.1} parent=55 // pred_region
          %s312 = sand.u32 %s107, 1
          %s313 = scalar_lea.sflag [#allocation5], %s312
          %s314 = sand.u32 %s107, 1
          %s315 = scalar_lea.vmem [#allocation8], %s314
          %316 = dma.done %s313, 16
        $region60: #{tpu_custom_call.1} parent=55 // pred_fallthru
          _
      $region56: #{tpu_custom_call.1} parent=5 // pred_fallthru
        _
    $region6: #{tpu_custom_call.1} parent=1 // loop_footer
      %s21 = sadd.s32 1, %s17
    $region7: #{tpu_custom_call.1} parent=1 // loop_footer_branch
      %16 = sbr.rel target = $region3
    $region8: #{tpu_custom_call.1} parent=1 // loop_exit
      _
    %317 = vsyncpa [#allocation4], 1
    %s318 = scalar_lea.sflag [#allocation4], 1
    %319 = vsyncpa %s318, 1
    %320 = vsyncpa [#allocation7], 1
    %s321 = scalar_lea.sflag [#allocation7], 1
    %322 = vsyncpa %s321, 1
    %323 = vsyncpa [#allocation5], 1
    %s324 = scalar_lea.sflag [#allocation5], 1
    %325 = vsyncpa %s324, 1

</llo_original>
